<compile_context>
chip_gen: v7x
topology: tpu7x:2x2x1
jax: 0.10.0
libtpu: 0.0.40
codegen_flags: <defaults>
</compile_context>

<pallas_src>
import math
import numpy as np

import jax
import jax.numpy as jnp
from jax import lax
from jax.experimental import pallas as pl
from jax.experimental.pallas import tpu as pltpu

_BN_EPS = 1e-5
_VMEM_LIMIT = 64 * 1024 * 1024


def _round_up(x, m):
    return (x + m - 1) // m * m


# ----------------------------------------------------------------------------
# Fused grouped GEMM kernel: out[g] = act(A[g] @ B[g] + bias[g] [+ res[g]])
# bf16 operands, f32 MXU accumulation.  Grid = (G, M/tm, N/tn, K/tk).
# ----------------------------------------------------------------------------
_KERNEL_CACHE = {}


def _gemm_kernel(has_res, act, single_k):
    key = (has_res, act, single_k)
    if key in _KERNEL_CACHE:
        return _KERNEL_CACHE[key]

    def epilogue(y, bias_ref, r_ref, o_ref):
        y = y + bias_ref[0]
        if r_ref is not None:
            y = y + r_ref[0].astype(jnp.float32)
        if act == 'relu':
            y = jnp.maximum(y, 0.0)
        elif act == 'sigmoid':
            # exp on EUP + approximate reciprocal on EUP -> no VALU divide
            y = pl.reciprocal(1.0 + jnp.exp(-y), approx=True)
        o_ref[0] = y.astype(o_ref.dtype)

    if single_k:
        def kernel(*refs):
            if has_res:
                a_ref, b_ref, bias_ref, r_ref, o_ref = refs
            else:
                a_ref, b_ref, bias_ref, o_ref = refs
                r_ref = None
            y = jnp.dot(a_ref[0], b_ref[0], preferred_element_type=jnp.float32)
            epilogue(y, bias_ref, r_ref, o_ref)
    else:
        def kernel(*refs):
            if has_res:
                a_ref, b_ref, bias_ref, r_ref, o_ref, acc_ref = refs
            else:
                a_ref, b_ref, bias_ref, o_ref, acc_ref = refs
                r_ref = None
            k = pl.program_id(3)

            @pl.when(k == 0)
            def _():
                acc_ref[...] = jnp.zeros_like(acc_ref)

            acc_ref[...] += jnp.dot(a_ref[0], b_ref[0],
                                    preferred_element_type=jnp.float32)

            @pl.when(k == pl.num_programs(3) - 1)
            def _():
                epilogue(acc_ref[...], bias_ref, r_ref, o_ref)

    _KERNEL_CACHE[key] = kernel
    return kernel


def _pick_tiles(M, Kp, Np):
    # tm: large tiles (less weight re-streaming) chosen to divide M exactly
    if M % 256 == 0:
        tm = 256
    elif M % 128 == 0:
        tm = 128
    elif M <= 256:
        tm = _round_up(M, 16)
    else:
        tm = 128
    # tn: very wide tiles when the GEMM is weight-DMA bound (tiny M)
    n_cands = (1024, 512, 256, 128) if M <= 256 else (512, 256, 128)
    tn = Np
    for cand in n_cands:
        if Np % cand == 0:
            tn = cand
            break
    # tk: full K whenever the blocks stay comfortably inside VMEM
    if Kp <= 4608 or Kp % 128 != 0:
        tk = Kp
    else:
        tk = Kp
        for cand in (2048, 1024, 512, 256, 128):
            if Kp % cand == 0:
                tk = cand
                break
    return tm, tn, tk


def fused_gemm(a, b_p, bias_p, n_out, residual=None, act=None,
               out_dtype=jnp.bfloat16):
    """a:(G,M,K) float; b_p:(G,Kp,Np) bf16 prepadded (BN scale folded);
    bias_p:(G,1,Np) f32 prepadded.  Returns (G, M, n_out) in out_dtype."""
    G, M, K = a.shape
    _, Kp, Np = b_p.shape

    tm, tn, tk = _pick_tiles(M, Kp, Np)
    Mp = _round_up(M, tm)

    if a.dtype != jnp.bfloat16:
        a = a.astype(jnp.bfloat16)
    if (Mp, Kp) != (M, K):
        a = jnp.pad(a, ((0, 0), (0, Mp - M), (0, Kp - K)))

    inputs = [a, b_p, bias_p]
    in_specs = [
        pl.BlockSpec((1, tm, tk), lambda g, i, j, k: (g, i, k)),
        pl.BlockSpec((1, tk, tn), lambda g, i, j, k: (g, k, j)),
        pl.BlockSpec((1, 1, tn), lambda g, i, j, k: (g, 0, j)),
    ]
    has_res = residual is not None
    if has_res:
        r = residual
        if r.dtype != jnp.bfloat16:
            r = r.astype(jnp.bfloat16)
        if r.shape != (G, Mp, Np):
            r = jnp.pad(r, ((0, 0), (0, Mp - r.shape[1]), (0, Np - r.shape[2])))
        inputs.append(r)
        in_specs.append(pl.BlockSpec((1, tm, tn), lambda g, i, j, k: (g, i, j)))

    nk = Kp // tk
    single_k = (nk == 1)
    scratch = [] if single_k else [pltpu.VMEM((tm, tn), jnp.float32)]

    out = pl.pallas_call(
        _gemm_kernel(has_res, act, single_k),
        out_shape=jax.ShapeDtypeStruct((G, Mp, Np), out_dtype),
        grid_spec=pltpu.PrefetchScalarGridSpec(
            num_scalar_prefetch=0,
            grid=(G, Mp // tm, Np // tn, nk),
            in_specs=in_specs,
            out_specs=pl.BlockSpec((1, tm, tn), lambda g, i, j, k: (g, i, j)),
            scratch_shapes=scratch,
        ),
        compiler_params=pltpu.CompilerParams(
            dimension_semantics=("parallel", "parallel", "parallel",
                                 "arbitrary"),
            vmem_limit_bytes=_VMEM_LIMIT),
    )(*inputs)

    if (Mp, Np) != (M, n_out):
        out = out[:, :M, :n_out]
    return out


# ----------------------------------------------------------------------------
# Conv glue (NHWC).  1x1 convs bypass im2col completely.
# ----------------------------------------------------------------------------
def im2col(x, kh, kw, stride, padding):
    N, H, W, C = x.shape
    Ho = (H + 2 * padding - kh) // stride + 1
    Wo = (W + 2 * padding - kw) // stride + 1
    xp = jnp.pad(x, ((0, 0), (padding, padding), (padding, padding), (0, 0)))
    cols = []
    for i in range(kh):
        for j in range(kw):
            cols.append(xp[:, i:i + stride * (Ho - 1) + 1:stride,
                           j:j + stride * (Wo - 1) + 1:stride, :])
    patches = jnp.stack(cols, axis=3)              # (N,Ho,Wo,kh*kw,C) bf16
    return patches.reshape(N * Ho * Wo, kh * kw * C), (N, Ho, Wo)


def conv_bn_act(x, cp, stride, padding, act, residual=None):
    kh, kw, cout = cp['kh'], cp['kw'], cp['cout']
    if kh == 1 and kw == 1:
        xs = x[:, ::stride, ::stride, :] if stride > 1 else x
        N, Ho, Wo, Cin = xs.shape
        a = xs.reshape(1, N * Ho * Wo, Cin)
    else:
        # TODO(synk): fold taps into the GEMM grid (no im2col materialization)
        a2, (N, Ho, Wo) = im2col(x, kh, kw, stride, padding)
        a = a2[None]
    res = (residual.reshape(1, N * Ho * Wo, cout)
           if residual is not None else None)
    y = fused_gemm(a, cp['wmat'], cp['bias_p'], cout, residual=res, act=act)
    return y.reshape(N, Ho, Wo, cout)


def bottleneck_fwd(x, blk):
    s = blk['stride']
    out = conv_bn_act(x, blk['c1'], 1, 0, 'relu')
    out = conv_bn_act(out, blk['c2'], s, 1, 'relu')
    if 'down' in blk:
        identity = conv_bn_act(x, blk['down'], s, 0, None)
    else:
        identity = x
    # conv3 -> bn3 -> (+identity) -> relu fused in GEMM epilogue
    return conv_bn_act(out, blk['c3'], 1, 0, 'relu', residual=identity)


# ----------------------------------------------------------------------------
# Pooling / head kernels
# ----------------------------------------------------------------------------
def maxpool_3x3_s2(x):
    """nn.MaxPool2d(3, stride=2, padding=1) on NHWC as a fused strided
    jnp.maximum tree (no (M,9,C) patch stack)."""
    N, H, W, C = x.shape
    Ho = (H + 2 - 3) // 2 + 1
    Wo = (W + 2 - 3) // 2 + 1
    xp = jnp.pad(x, ((0, 0), (1, 1), (1, 1), (0, 0)),
                 constant_values=-jnp.inf)
    m = None
    for i in range(3):
        for j in range(3):
            s = xp[:, i:i + 2 * (Ho - 1) + 1:2, j:j + 2 * (Wo - 1) + 1:2, :]
            m = s if m is None else jnp.maximum(m, s)
    return m


def parts_avgpool(x, parts):
    """AdaptiveAvgPool2d((parts, 1)) on NHWC, Hf divisible by parts.
    Lane-dense (rows, C) reduce, one batch element per grid step."""
    N, Hf, Wf, C = x.shape
    assert Hf % parts == 0  # TODO(synk): general adaptive bucketing otherwise
    hpp = Hf // parts
    rows = hpp * Wf
    xr = x.reshape(N, Hf * Wf, C)

    def kernel(x_ref, o_ref):
        xv = x_ref[0].astype(jnp.float32)                 # (Hf*Wf, C)
        o_ref[0] = jnp.mean(xv.reshape(parts, rows, C), axis=1)

    return pl.pallas_call(
        kernel,
        out_shape=jax.ShapeDtypeStruct((N, parts, C), jnp.float32),
        grid=(N,),
        in_specs=[pl.BlockSpec((1, Hf * Wf, C), lambda n: (n, 0, 0))],
        out_specs=pl.BlockSpec((1, parts, C), lambda n: (n, 0, 0)),
        compiler_params=pltpu.CompilerParams(
            dimension_semantics=("parallel",)),
    )(xr)


def mask_and_normalize(v, m):
    """out[n,p,:] = (v*m)[n,p,:] / max(||(v*m)[n,p,:]||_2, 1e-12)."""
    N, parts, C = v.shape

    def kernel(v_ref, m_ref, o_ref):
        vv = v_ref[0] * m_ref[0]                                   # (parts, C)
        ss = jnp.sum(vv * vv, axis=-1, keepdims=True)
        o_ref[0] = vv * lax.rsqrt(jnp.maximum(ss, 1e-24))          # EUP rsqrt

    return pl.pallas_call(
        kernel,
        out_shape=jax.ShapeDtypeStruct((N, parts, C), jnp.float32),
        grid=(N,),
        in_specs=[pl.BlockSpec((1, parts, C), lambda n: (n, 0, 0)),
                  pl.BlockSpec((1, parts, C), lambda n: (n, 0, 0))],
        out_specs=pl.BlockSpec((1, parts, C), lambda n: (n, 0, 0)),
        compiler_params=pltpu.CompilerParams(
            dimension_semantics=("parallel",)),
    )(v.astype(jnp.float32), m.astype(jnp.float32))


# ----------------------------------------------------------------------------
# PCB eval-mode forward
# ----------------------------------------------------------------------------
def pcb_forward(params, x_nchw):
    parts = params['parts']
    x = jnp.transpose(x_nchw, (0, 2, 3, 1)).astype(jnp.bfloat16)   # NCHW->NHWC

    # featuremaps()
    x = conv_bn_act(x, params['stem'], 2, 3, 'relu')
    x = maxpool_3x3_s2(x)
    for blk in params['blocks']:
        x = bottleneck_fwd(x, blk)
    Nb, Hf, Wf, C = x.shape                                        # C = 2048

    # TODO(synk): global_avgpool + decode (ConvTranspose reconstruction), em
    # 1x1+BN embedding layers, per-part classifiers and dropout are training-
    # only / dead code for the eval-mode return value and are not computed.

    v_parts = parts_avgpool(x, parts)                              # (N,parts,C) f32

    # grouped per-part attention MLP: sigmoid(W2 @ relu(BN(W1 @ v_part)))
    a0 = jnp.transpose(v_parts, (1, 0, 2)).astype(jnp.bfloat16)    # (parts,N,C)
    g1, g2 = params['mlp_g']['m1'], params['mlp_g']['m2']
    h = fused_gemm(a0, g1['wmat'], g1['bias_p'], g1['cout'], act='relu')
    att = fused_gemm(h, g2['wmat'], g2['bias_p'], g2['cout'], act='sigmoid',
                     out_dtype=jnp.float32)                        # (parts,N,C)
    mask_da = jnp.transpose(att, (1, 0, 2))                        # (N,parts,C)

    # reproduce the module's reshape mixing: (N,6,2048) -> (N,2048*6) -> (N,2048,6)
    md_mixed = mask_da.reshape(Nb, parts * C).reshape(Nb, C, parts)
    md_t = jnp.transpose(md_mixed, (0, 2, 1))                      # (N,parts,C)

    v_norm = mask_and_normalize(v_parts, md_t)                     # (N,parts,C)
    v_gg = jnp.transpose(v_norm, (0, 2, 1))                        # (N,2048,parts)
    mask = jnp.ones((Nb, parts), jnp.float32)
    return v_gg, mask


# ----------------------------------------------------------------------------
# Deterministic parameter construction (mirrors PCB._init_params, eval-mode BN)
# Weight preprocessing (fold BN scale, transpose, pad, bf16 cast, MLP weight
# stacking for the grouped GEMM) done ONCE here.
# ----------------------------------------------------------------------------
def make_conv_params(key, cout, cin, kh, kw, with_bn=True):
    std = math.sqrt(2.0 / (cout * kh * kw))            # kaiming fan_out / relu
    w = (std * jax.random.normal(key, (cout, cin, kh, kw))).astype(jnp.float32)
    if with_bn:  # eval BN with gamma=1, beta=0, running_mean=0, running_var=1
        scale = jnp.full((cout,), 1.0 / math.sqrt(1.0 + _BN_EPS), jnp.float32)
        bias = jnp.zeros((cout,), jnp.float32)
    else:        # conv bias init 0, no BN
        scale = jnp.ones((cout,), jnp.float32)
        bias = jnp.zeros((cout,), jnp.float32)
    w_fold = (w * scale[:, None, None, None]).astype(jnp.bfloat16)
    K = kh * kw * cin
    Kp = max(_round_up(K, 16), 128)                    # fine-grained K padding
    Np = _round_up(cout, 128)                          # lane-dense output
    wmat = jnp.transpose(w_fold, (2, 3, 1, 0)).reshape(K, cout)
    wmat = jnp.pad(wmat, ((0, Kp - K), (0, Np - cout)))[None]      # (1,Kp,Np)
    bias_p = jnp.pad(bias, (0, Np - cout)).reshape(1, 1, Np)       # (1,1,Np)
    return dict(kh=kh, kw=kw, cout=cout, wmat=wmat, bias_p=bias_p,
                w_ref=w_fold, b_ref=bias)


def build_pcb_params(key, layers=(1, 1, 1, 1), parts=6):
    expansion = 4
    keys = iter(jax.random.split(key, 64))
    params = {'parts': parts,
              'stem': make_conv_params(next(keys), 64, 3, 7, 7)}
    blocks = []
    inplanes = 64
    for planes, nblk, lstride in zip((64, 128, 256, 512), layers, (1, 2, 2, 1)):
        for bi in range(nblk):
            s = lstride if bi == 0 else 1
            blk = dict(
                stride=s,
                c1=make_conv_params(next(keys), planes, inplanes, 1, 1),
                c2=make_conv_params(next(keys), planes, planes, 3, 3),
                c3=make_conv_params(next(keys), planes * expansion, planes, 1, 1))
            if s != 1 or inplanes != planes * expansion:
                blk['down'] = make_conv_params(next(keys), planes * expansion,
                                               inplanes, 1, 1)
            blocks.append(blk)
            inplanes = planes * expansion
    params['blocks'] = blocks
    mlp = [dict(m1=make_conv_params(next(keys), 2048, 2048, 1, 1),
                m2=make_conv_params(next(keys), 2048, 2048, 1, 1,
                                    with_bn=False))
           for _ in range(parts)]
    params['mlp'] = mlp
    # stacked (parts, Kp, Np) weights for the grouped attention-MLP GEMMs
    params['mlp_g'] = dict(
        m1=dict(wmat=jnp.concatenate([m['m1']['wmat'] for m in mlp], axis=0),
                bias_p=jnp.concatenate([m['m1']['bias_p'] for m in mlp], axis=0),
                cout=2048),
        m2=dict(wmat=jnp.concatenate([m['m2']['wmat'] for m in mlp], axis=0),
                bias_p=jnp.concatenate([m['m2']['bias_p'] for m in mlp], axis=0),
                cout=2048))
    return params


# ----------------------------------------------------------------------------
# Pure-JAX reference (same bf16-rounded folded weights, independent code path)
# ----------------------------------------------------------------------------
def ref_forward(params, x_nchw):
    parts = params['parts']
    x = jnp.transpose(x_nchw, (0, 2, 3, 1)).astype(jnp.bfloat16)

    def conv(x, cp, stride, pad, act, residual=None):
        y = lax.conv_general_dilated(
            x, cp['w_ref'], (stride, stride), [(pad, pad), (pad, pad)],
            dimension_numbers=('NHWC', 'OIHW', 'NHWC'),
            preferred_element_type=jnp.float32)
        y = y + cp['b_ref']
        if residual is not None:
            y = y + residual.astype(jnp.float32)
        if act == 'relu':
            y = jnp.maximum(y, 0.0)
        return y.astype(jnp.bfloat16)

    x = conv(x, params['stem'], 2, 3, 'relu')
    x = lax.reduce_window(x.astype(jnp.float32), -jnp.inf, lax.max,
                          (1, 3, 3, 1), (1, 2, 2, 1),
                          [(0, 0), (1, 1), (1, 1), (0, 0)]).astype(jnp.bfloat16)
    for blk in params['blocks']:
        s = blk['stride']
        out = conv(x, blk['c1'], 1, 0, 'relu')
        out = conv(out, blk['c2'], s, 1, 'relu')
        identity = conv(x, blk['down'], s, 0, None) if 'down' in blk else x
        x = conv(out, blk['c3'], 1, 0, 'relu', residual=identity)

    Nb, Hf, Wf, C = x.shape
    hpp = Hf // parts
    f32 = x.astype(jnp.float32)
    v_parts = jnp.mean(f32.reshape(Nb, parts, hpp, Wf, C), axis=(2, 3))

    att = []
    for i in range(parts):
        m1, m2 = params['mlp'][i]['m1'], params['mlp'][i]['m2']
        vi = v_parts[:, i, :].astype(jnp.bfloat16)
        w1 = m1['w_ref'][:, :, 0, 0]
        h = jnp.dot(vi, w1.T, preferred_element_type=jnp.float32) + m1['b_ref']
        h = jnp.maximum(h, 0.0).astype(jnp.bfloat16)
        w2 = m2['w_ref'][:, :, 0, 0]
        a = jnp.dot(h, w2.T, preferred_element_type=jnp.float32) + m2['b_ref']
        att.append(1.0 / (1.0 + jnp.exp(-a)))
    mask_da = jnp.stack(att, axis=1)                               # (N,parts,C)
    md_mixed = mask_da.reshape(Nb, parts * C).reshape(Nb, C, parts)
    v_pt = jnp.transpose(v_parts, (0, 2, 1))                       # (N,C,parts)
    vg = v_pt * md_mixed
    norm = jnp.maximum(jnp.sqrt(jnp.sum(vg * vg, axis=1, keepdims=True)), 1e-12)
    return vg / norm, jnp.ones((Nb, parts), jnp.float32)


if __name__ == "__main__":
    key = jax.random.PRNGKey(0)
    kp, kx = jax.random.split(key)
    params = build_pcb_params(kp, layers=(1, 1, 1, 1), parts=6)
    # small input: NCHW, height chosen so the 2048-ch feature map height (6)
    # divides evenly into the 6 part strips.
    x = jax.random.normal(kx, (2, 3, 96, 32), jnp.float32)

    v_gg, mask = pcb_forward(params, x)
    v_gg = jax.block_until_ready(v_gg)
    mask = jax.block_until_ready(mask)
    assert v_gg.shape == (2, 2048, 6) and mask.shape == (2, 6)

    v_ref, _ = ref_forward(params, x)
    v_ref = jax.block_until_ready(v_ref)
    np.testing.assert_allclose(np.asarray(v_gg), np.asarray(v_ref),
                               rtol=5e-2, atol=5e-3)
    print("KERNEL_OK")
</pallas_src>

<mosaic_0001>
module attributes {stable_mosaic.version = 11 : i64} {
  func.func @kernel(%arg0: i32, %arg1: i32, %arg2: i32, %arg3: i32, %arg4: memref<1x256x160xbf16, #tpu.memory_space<vmem>>, %arg5: memref<1x160x128xbf16, #tpu.memory_space<vmem>>, %arg6: memref<1x1x128xf32, #tpu.memory_space<vmem>>, %arg7: memref<1x256x128xbf16, #tpu.memory_space<vmem>>) attributes {dimension_semantics = [#tpu.dimension_semantics<parallel>, #tpu.dimension_semantics<parallel>, #tpu.dimension_semantics<parallel>, #tpu.dimension_semantics<arbitrary>], iteration_bounds = array<i64: 1, 6, 1, 1>, scalar_prefetch = 0 : i64, scratch_operands = 0 : i64, tpu.core_type = #tpu.core_type<tc>, window_params = [{transform_indices = @transform_0, window_bounds = array<i64: 1, 256, 160>}, {transform_indices = @transform_1, window_bounds = array<i64: 1, 160, 128>}, {transform_indices = @transform_2, window_bounds = array<i64: 1, 1, 128>}, {transform_indices = @transform_3, window_bounds = array<i64: 1, 256, 128>}]} {
    %c0 = arith.constant 0 : index
    %c0_0 = arith.constant 0 : index
    %c0_1 = arith.constant 0 : index
    %0 = vector.load %arg4[%c0, %c0_0, %c0_1] : memref<1x256x160xbf16, #tpu.memory_space<vmem>>, vector<1x256x160xbf16>
    %1 = vector.shape_cast %0 : vector<1x256x160xbf16> to vector<256x160xbf16>
    %c0_2 = arith.constant 0 : index
    %c0_3 = arith.constant 0 : index
    %c0_4 = arith.constant 0 : index
    %2 = vector.load %arg5[%c0_2, %c0_3, %c0_4] : memref<1x160x128xbf16, #tpu.memory_space<vmem>>, vector<1x160x128xbf16>
    %3 = vector.shape_cast %2 : vector<1x160x128xbf16> to vector<160x128xbf16>
    %cst = arith.constant dense<0.000000e+00> : vector<256x128xf32>
    %4 = tpu.matmul %1, %3, %cst {dimension_numbers = #tpu.dot_dimension_numbers<[1], [0], [0], [1], [0, 0, 1, 1], [], []>} : vector<256x160xbf16>, vector<160x128xbf16>, vector<256x128xf32> -> vector<256x128xf32>
    %c0_5 = arith.constant 0 : index
    %c0_6 = arith.constant 0 : index
    %c0_7 = arith.constant 0 : index
    %5 = vector.load %arg6[%c0_5, %c0_6, %c0_7] : memref<1x1x128xf32, #tpu.memory_space<vmem>>, vector<1x1x128xf32>
    %6 = vector.shape_cast %5 : vector<1x1x128xf32> to vector<1x128xf32>
    %7 = vector.broadcast %6 : vector<1x128xf32> to vector<256x128xf32>
    %8 = arith.addf %4, %7 : vector<256x128xf32>
    %cst_8 = arith.constant 0.000000e+00 : f32
    %9 = vector.broadcast %cst_8 : f32 to vector<256x128xf32>
    %10 = arith.maximumf %8, %9 : vector<256x128xf32>
    %11 = arith.truncf %10 : vector<256x128xf32> to vector<256x128xbf16>
    %c0_9 = arith.constant 0 : index
    %c0_10 = arith.constant 0 : index
    %c0_11 = arith.constant 0 : index
    %12 = vector.load %arg7[%c0_9, %c0_10, %c0_11] : memref<1x256x128xbf16, #tpu.memory_space<vmem>>, vector<1x256x128xbf16>
    %13 = vector.shape_cast %12 : vector<1x256x128xbf16> to vector<256x128xbf16>
    %14 = vector.shape_cast %11 : vector<256x128xbf16> to vector<1x256x128xbf16>
    tpu.vector_store %arg7[%c0_9, %c0_10, %c0_11], %14 {strides = array<i32>} : memref<1x256x128xbf16, #tpu.memory_space<vmem>>, vector<1x256x128xbf16>,
    return
  }
  func.func @transform_0(%arg0: i32, %arg1: i32, %arg2: i32, %arg3: i32) -> (i32, i32, i32) {
    %c0_i32 = arith.constant 0 : i32
    return %arg0, %arg1, %arg3 : i32, i32, i32
  }
  func.func @transform_1(%arg0: i32, %arg1: i32, %arg2: i32, %arg3: i32) -> (i32, i32, i32) {
    %c0_i32 = arith.constant 0 : i32
    return %arg0, %arg3, %arg2 : i32, i32, i32
  }
  func.func @transform_2(%arg0: i32, %arg1: i32, %arg2: i32, %arg3: i32) -> (i32, i32, i32) {
    %c0_i32 = arith.constant 0 : i32
    %c0_i32_0 = arith.constant 0 : i32
    return %arg0, %c0_i32, %arg2 : i32, i32, i32
  }
  func.func @transform_3(%arg0: i32, %arg1: i32, %arg2: i32, %arg3: i32) -> (i32, i32, i32) {
    %c0_i32 = arith.constant 0 : i32
    return %arg0, %arg1, %arg2 : i32, i32, i32
  }
}

</mosaic_0001>

<llo_original>
// kernel: tpu_custom_call.1
$region0: #{tpu_custom_call.1}
  #allocation0 [shape = 'u32[]', space=smem, size = 0x4, offset = 0x4, fixed_abs, tag = 'smem constant byte address 0x4 - core index']
  #allocation1 [shape = 'u32[144,128]{1,0:T(1,128)}', space=vmem, size = 0x12000, scoped, tag = 'internal scratch']
  %s0 = inlined_call_operand.hbm [shape: bf16[1,1536,160], index: 0, kind: input, shape index: {}]
  %s1 = inlined_call_operand.hbm [shape: bf16[1,160,128], index: 1, kind: input, shape index: {}]
  %s2 = inlined_call_operand.hbm [shape: f32[1,1,128], index: 2, kind: input, shape index: {}]
  %s3 = inlined_call_operand.hbm [shape: bf16[1,1536,128], index: 3, kind: output, shape index: {}]
  %s4 = sld [smem:[#allocation0]]
  $region57: #{tpu_custom_call.1} parent=0
    _
  %s6 = ssub.s32 1, %s4
  %s7 = scalar_select 0, %s6, %s4
  $region1: #{tpu_custom_call.1} parent=0
    #allocation2 [shape = 'u8[262144]{0}', space=vmem, size = 0x40000, scoped, tag = 'input window, operand 0']
    #allocation3 [shape = 's32[2]{0}', space=sflag, size = 0x8, scoped, tag = 'scoped memory for tpu_custom_call.1']
    #allocation4 [shape = 's32[2]{0}', space=sflag, size = 0x8, scoped, tag = 'scoped memory for tpu_custom_call.1']
    #allocation5 [shape = 'u8[40960]{0}', space=vmem, size = 0xa000, scoped, tag = 'input window, operand 1, single buffered']
    #allocation6 [shape = 's32[1]{0}', space=sflag, size = 0x4, scoped, tag = 'scoped memory for tpu_custom_call.1']
    #allocation7 [shape = 'u8[512]{0}', space=vmem, size = 0x400, scoped, tag = 'input window, operand 2, single buffered']
    #allocation8 [shape = 'u8[131072]{0}', space=vmem, size = 0x20000, scoped, tag = 'output window, operand 0']
    %8 = vsyncpa [#allocation3], 0
    %s9 = scalar_lea.sflag [#allocation3], 1
    %10 = vsyncpa %s9, 0
    %11 = vsyncpa [#allocation6], 0
    %12 = vsyncpa [#allocation4], 0
    %s13 = scalar_lea.sflag [#allocation4], 1
    %14 = vsyncpa %s13, 0
    loop: start=0, step=1, limit=8
    $region2: #{tpu_custom_call.1} parent=1 // loop_pre_header
      _
    $region3: #{tpu_custom_call.1} parent=1 // loop_header
      %s16 = sphi 0, %s20
      %p17 = scmp.ge.s32.totalorder %s16, 8
      %s23 = sphi 0, %s49
      %s24 = sphi 0, %s45
      %s25 = sphi 0, %s41
      %s26 = sphi 0, %s37
      %s27 = sphi 0, %s23
      %s28 = sphi 0, %s24
      %s29 = sphi 0, %s25
      %s30 = sphi 0, %s26
      %s31 = sphi 0, %s27
      %s32 = sphi 0, %s28
      %s33 = sphi 0, %s29
      %s34 = sphi 0, %s30
      %s56 = sphi 0, %s58
      %s59 = sphi 0, %s56
      %s60 = sphi 0, %s59
      %s76 = sphi 0, %s60
      %s86 = sphi 0, %s88
      %s89 = sphi 0, %s86
      %s90 = sphi 0, %s89
      %s106 = sphi 0, %s90
      %s114 = sphi 0, %s116
      %s117 = sphi 0, %s114
      %s118 = sphi 0, %s117
      %s134 = sphi 0, %s118
      %s144 = sphi 0, %s146
      %s147 = sphi 0, %s144
      %s148 = sphi 0, %s147
      %s164 = sphi 0, %s148
    $region4: #{tpu_custom_call.1} parent=1 // loop_header_branch
      %19 = sbr.rel (%p17) target = $region8
    $region5: #{tpu_custom_call.1} parent=1 // loop_body
      %s21 = ssub.s32 %s16, 1
      %s22 = ssub.s32 %s16, 2
      %s35 = sadd.s32 1, %s26
      %p36 = scmp.ge.s32.totalorder %s35, 1
      %s37 = scalar_select %p36, 0, %s35
      %s38 = sadd.s32 1, %s25
      %s39 = scalar_select %p36, %s38, %s25
      %p40 = scmp.ge.s32.totalorder %s39, 1
      %s41 = scalar_select %p40, 0, %s39
      %s42 = sadd.s32 1, %s24
      %s43 = scalar_select %p40, %s42, %s24
      %p44 = scmp.ge.s32.totalorder %s43, 6
      %s45 = scalar_select %p44, 0, %s43
      %s46 = sadd.s32 1, %s23
      %s47 = scalar_select %p44, %s46, %s23
      %p48 = scmp.ge.s32.totalorder %s47, 1
      %s49 = scalar_select %p48, 0, %s47
      %s50 = ssub.s32 %s23, %s49
      %s51 = ssub.s32 %s24, %s45
      %s52 = sor.u32 %s50, %s51
      %s53 = ssub.s32 %s26, %s37
      %s54 = sor.u32 %s52, %s53
      %p55 = scmp.eq.s32.totalorder %s54, 0
      %s57 = sadd.s32 %s56, 1
      %s58 = scalar_select %p55, %s56, %s57
      %p61 = pneg %p55
      %p62 = scmp.eq.s32.totalorder %s16, 5
      %p63 = por %p61, %p62
      %p64 = scmp.ne.s32.totalorder %s56, %s59
      %p65 = scmp.eq.s32.totalorder %s16, 0
      %p66 = por %p64, %p65
      %p67 = scmp.ne.s32.totalorder %s56, %s59
      %p68 = scmp.eq.s32.totalorder %s21, 5
      %p69 = por %p67, %p68
      %p70 = scmp.ne.s32.totalorder %s59, %s60
      %p71 = scmp.eq.s32.totalorder %s21, 0
      %p72 = por %p70, %p71
      %p73 = scmp.ne.s32.totalorder %s59, %s60
      %p74 = scmp.eq.s32.totalorder %s22, 5
      %p75 = por %p73, %p74
      %p77 = scmp.ne.s32.totalorder %s60, %s76
      %p78 = scmp.eq.s32.totalorder %s22, 0
      %p79 = por %p77, %p78
      %s80 = ssub.s32 %s23, %s49
      %s81 = ssub.s32 %s26, %s37
      %s82 = sor.u32 %s80, %s81
      %s83 = ssub.s32 %s25, %s41
      %s84 = sor.u32 %s82, %s83
      %p85 = scmp.eq.s32.totalorder %s84, 0
      %s87 = sadd.s32 %s86, 1
      %s88 = scalar_select %p85, %s86, %s87
      %p91 = pneg %p85
      %p92 = scmp.eq.s32.totalorder %s16, 5
      %p93 = por %p91, %p92
      %p94 = scmp.ne.s32.totalorder %s86, %s89
      %p95 = scmp.eq.s32.totalorder %s16, 0
      %p96 = por %p94, %p95
      %p97 = scmp.ne.s32.totalorder %s86, %s89
      %p98 = scmp.eq.s32.totalorder %s21, 5
      %p99 = por %p97, %p98
      %p100 = scmp.ne.s32.totalorder %s89, %s90
      %p101 = scmp.eq.s32.totalorder %s21, 0
      %p102 = por %p100, %p101
      %p103 = scmp.ne.s32.totalorder %s89, %s90
      %p104 = scmp.eq.s32.totalorder %s22, 5
      %p105 = por %p103, %p104
      %p107 = scmp.ne.s32.totalorder %s90, %s106
      %p108 = scmp.eq.s32.totalorder %s22, 0
      %p109 = por %p107, %p108
      %s110 = ssub.s32 %s23, %s49
      %s111 = ssub.s32 %s25, %s41
      %s112 = sor.u32 %s110, %s111
      %p113 = scmp.eq.s32.totalorder %s112, 0
      %s115 = sadd.s32 %s114, 1
      %s116 = scalar_select %p113, %s114, %s115
      %p119 = pneg %p113
      %p120 = scmp.eq.s32.totalorder %s16, 5
      %p121 = por %p119, %p120
      %p122 = scmp.ne.s32.totalorder %s114, %s117
      %p123 = scmp.eq.s32.totalorder %s16, 0
      %p124 = por %p122, %p123
      %p125 = scmp.ne.s32.totalorder %s114, %s117
      %p126 = scmp.eq.s32.totalorder %s21, 5
      %p127 = por %p125, %p126
      %p128 = scmp.ne.s32.totalorder %s117, %s118
      %p129 = scmp.eq.s32.totalorder %s21, 0
      %p130 = por %p128, %p129
      %p131 = scmp.ne.s32.totalorder %s117, %s118
      %p132 = scmp.eq.s32.totalorder %s22, 5
      %p133 = por %p131, %p132
      %p135 = scmp.ne.s32.totalorder %s118, %s134
      %p136 = scmp.eq.s32.totalorder %s22, 0
      %p137 = por %p135, %p136
      %s138 = ssub.s32 %s23, %s49
      %s139 = ssub.s32 %s24, %s45
      %s140 = sor.u32 %s138, %s139
      %s141 = ssub.s32 %s25, %s41
      %s142 = sor.u32 %s140, %s141
      %p143 = scmp.eq.s32.totalorder %s142, 0
      %s145 = sadd.s32 %s144, 1
      %s146 = scalar_select %p143, %s144, %s145
      %p149 = pneg %p143
      %p150 = scmp.eq.s32.totalorder %s16, 5
      %p151 = por %p149, %p150
      %p152 = scmp.ne.s32.totalorder %s144, %s147
      %p153 = scmp.eq.s32.totalorder %s16, 0
      %p154 = por %p152, %p153
      %p155 = scmp.ne.s32.totalorder %s144, %s147
      %p156 = scmp.eq.s32.totalorder %s21, 5
      %p157 = por %p155, %p156
      %p158 = scmp.ne.s32.totalorder %s147, %s148
      %p159 = scmp.eq.s32.totalorder %s21, 0
      %p160 = por %p158, %p159
      %p161 = scmp.ne.s32.totalorder %s147, %s148
      %p162 = scmp.eq.s32.totalorder %s22, 5
      %p163 = por %p161, %p162
      %p165 = scmp.ne.s32.totalorder %s148, %s164
      %p166 = scmp.eq.s32.totalorder %s22, 0
      %p167 = por %p165, %p166
      %p168 = scmp.le.s32.totalorder 1, %s16
      %p169 = scmp.lt.s32.totalorder %s16, 7
      %p170 = pnand %p168, %p169
      %p171 = pneg %p170
      // Predicated region
      $region9: #{tpu_custom_call.1} parent=5 // pred_check
        _
      $region10: #{tpu_custom_call.1} parent=5 // pred_check_branch
        %173 = sbr.rel (%p170) target = $region12
      $region11: #{tpu_custom_call.1} parent=5 // pred_region
        %s174 = ssub.s32 %s16, 1
        // Predicated region
        $region13: #{tpu_custom_call.1} parent=11 // pred_check
          %p175 = pneg %p102
        $region14: #{tpu_custom_call.1} parent=11 // pred_check_branch
          %177 = sbr.rel (%p175) target = $region16
        $region15: #{tpu_custom_call.1} parent=11 // pred_region
          %s178 = smul.u32 20, %s30
          %s180 = ssub.s32 1280, 1280
          %181 = vsyncadd [#allocation6], %s180
          %s182 = sadd.s32 %s29, %s178
          %s183 = smul.addr %s27, 20
          %s184 = sadd.s32 %s182, %s183
          %s185 = smul.addr %s184, 64
          %s186 = scalar_lea.hbm %s1, %s185
          %s187 = sshll.u32 [#allocation5], 4
          %s188 = int_to_ptr.vmem [resolvable:$true] %s187
          %193 = dma.hbm_to_vmem [thread:$0]  %s186, 1280, %s188, [#allocation6], 64, 64, 4
        $region16: #{tpu_custom_call.1} parent=11 // pred_fallthru
          _
        // Predicated region
        $region17: #{tpu_custom_call.1} parent=11 // pred_check
          %p194 = pneg %p130
        $region18: #{tpu_custom_call.1} parent=11 // pred_check_branch
          %196 = sbr.rel (%p194) target = $region20
        $region19: #{tpu_custom_call.1} parent=11 // pred_region
          %s198 = ssub.s32 16, 16
          %199 = vsyncadd [#allocation6], %s198
          %s200 = sadd.s32 %s29, %s27
          %s201 = smul.addr %s200, 16
          %s202 = scalar_lea.hbm %s2, %s201
          %s204 = sshll.u32 [#allocation7], 4
          %s205 = int_to_ptr.vmem [resolvable:$true] %s204
          %207 = dma.hbm_to_vmem [thread:$0]  %s202, 16, %s205, [#allocation6]
        $region20: #{tpu_custom_call.1} parent=11 // pred_fallthru
          _
      $region12: #{tpu_custom_call.1} parent=5 // pred_fallthru
        _
      %p208 = scmp.lt.s32.totalorder %s16, 6
      // Predicated region
      $region21: #{tpu_custom_call.1} parent=5 // pred_check
        %p209 = pneg %p208
      $region22: #{tpu_custom_call.1} parent=5 // pred_check_branch
        %211 = sbr.rel (%p209) target = $region24
      $region23: #{tpu_custom_call.1} parent=5 // pred_region
        // Predicated region
        $region25: #{tpu_custom_call.1} parent=23 // pred_check
          %p212 = pneg %p66
        $region26: #{tpu_custom_call.1} parent=23 // pred_check_branch
          %214 = sbr.rel (%p212) target = $region28
        $region27: #{tpu_custom_call.1} parent=23 // pred_region
          %s215 = sand.u32 %s56, 1
          %s216 = scalar_lea.sflag [#allocation3], %s215
          %s217 = sand.u32 %s56, 1
          %s218 = smul.addr %s217, 256
          %s219 = scalar_lea.vmem [#allocation2], %s218
          %s220 = smul.u32 32, %s24
          %s221 = smul.u32 2, %s26
          %s223 = ssub.s32 4096, 4096
          %224 = vsyncadd %s216, %s223
          %s225 = smul.addr %s220, 2
          %s226 = sadd.s32 %s221, %s225
          %s227 = smul.addr %s23, 384
          %s228 = sadd.s32 %s226, %s227
          %s229 = smul.addr %s228, 64
          %s230 = scalar_lea.hbm %s0, %s229
          %s231 = sshll.u32 %s219, 4
          %s232 = int_to_ptr.vmem [resolvable:$true] %s231
          %237 = dma.hbm_to_vmem [thread:$0]  %s230, 4096, %s232, %s216, 128, 128, 8
        $region28: #{tpu_custom_call.1} parent=23 // pred_fallthru
          _
      $region24: #{tpu_custom_call.1} parent=5 // pred_fallthru
        _
      %p238 = scmp.le.s32.totalorder 1, %s16
      %p239 = scmp.lt.s32.totalorder %s16, 7
      %p240 = pnand %p238, %p239
      %p241 = pneg %p240
      // Predicated region
      $region29: #{tpu_custom_call.1} parent=5 // pred_check
        _
      $region30: #{tpu_custom_call.1} parent=5 // pred_check_branch
        %243 = sbr.rel (%p240) target = $region32
      $region31: #{tpu_custom_call.1} parent=5 // pred_region
        %s244 = ssub.s32 %s16, 1
        %s245 = sand.u32 %s59, 1
        %s246 = scalar_lea.sflag [#allocation3], %s245
        %s247 = sand.u32 %s59, 1
        %s248 = smul.addr %s247, 256
        %s249 = scalar_lea.vmem [#allocation2], %s248
        // Predicated region
        $region33: #{tpu_custom_call.1} parent=31 // pred_check
          %p250 = pneg %p72
        $region34: #{tpu_custom_call.1} parent=31 // pred_check_branch
          %252 = sbr.rel (%p250) target = $region36
        $region35: #{tpu_custom_call.1} parent=31 // pred_region
          %253 = dma.done %s246, 4096
        $region36: #{tpu_custom_call.1} parent=31 // pred_fallthru
          _
        // Predicated region
        $region37: #{tpu_custom_call.1} parent=31 // pred_check
          %p254 = pneg %p102
        $region38: #{tpu_custom_call.1} parent=31 // pred_check_branch
          %256 = sbr.rel (%p254) target = $region40
        $region39: #{tpu_custom_call.1} parent=31 // pred_region
          %257 = dma.done [#allocation6], 1280
        $region40: #{tpu_custom_call.1} parent=31 // pred_fallthru
          _
        // Predicated region
        $region41: #{tpu_custom_call.1} parent=31 // pred_check
          %p258 = pneg %p130
        $region42: #{tpu_custom_call.1} parent=31 // pred_check_branch
          %260 = sbr.rel (%p258) target = $region44
        $region43: #{tpu_custom_call.1} parent=31 // pred_region
          %261 = dma.done [#allocation6], 16
        $region44: #{tpu_custom_call.1} parent=31 // pred_fallthru
          _
        %s262 = sand.u32 %s59, 1
        %s263 = scalar_lea.sflag [#allocation3], %s262
        %s264 = sand.u32 %s59, 1
        %s265 = smul.addr %s264, 256
        %s266 = scalar_lea.vmem [#allocation2], %s265
        %p267 = pneg %p72
        %p268 = pneg %p69
        %p269 = pneg %p102
        %p270 = pneg %p99
        %p271 = pneg %p130
        %p272 = pneg %p127
        %p273 = pneg %p160
        %p274 = pneg %p157
        %s275 = sand.u32 %s147, 1
        %s276 = scalar_lea.sflag [#allocation4], %s275
        %s277 = sand.u32 %s147, 1
        %s278 = smul.addr %s277, 128
        %s279 = scalar_lea.vmem [#allocation8], %s278
        %s280 = smul.u32 32, %s28
        %s281 = smul.u32 2, %s30
        %s282 = smul.u32 20, %s30
        %s283 = smul.u32 32, %s28
        %v285 = vld [vmem:[%s249] sm:$0xff]
        %v286 = vld [vmem:[%s249 + $0x8] sm:$0xff]
        %v287 = vld [vmem:[%s249 + $0x10] sm:$0xff]
        %v288 = vld [vmem:[%s249 + $0x18] sm:$0xff]
        %v289 = vld [vmem:[%s249 + $0x20] sm:$0xff]
        %v290 = vld [vmem:[%s249 + $0x28] sm:$0xff]
        %v291 = vld [vmem:[%s249 + $0x30] sm:$0xff]
        %v292 = vld [vmem:[%s249 + $0x38] sm:$0xff]
        %v293 = vld [vmem:[%s249 + $0x40] sm:$0xff]
        %v294 = vld [vmem:[%s249 + $0x48] sm:$0xff]
        %v295 = vld [vmem:[%s249 + $0x50] sm:$0xff]
        %v296 = vld [vmem:[%s249 + $0x58] sm:$0xff]
        %v297 = vld [vmem:[%s249 + $0x60] sm:$0xff]
        %v298 = vld [vmem:[%s249 + $0x68] sm:$0xff]
        %v299 = vld [vmem:[%s249 + $0x70] sm:$0xff]
        %v300 = vld [vmem:[%s249 + $0x78] sm:$0xff]
        %v301 = vld [vmem:[%s249 + $0x80] sm:$0xff]
        %v302 = vld [vmem:[%s249 + $0x88] sm:$0xff]
        %v303 = vld [vmem:[%s249 + $0x90] sm:$0xff]
        %v304 = vld [vmem:[%s249 + $0x98] sm:$0xff]
        %v305 = vld [vmem:[%s249 + $0xa0] sm:$0xff]
        %v306 = vld [vmem:[%s249 + $0xa8] sm:$0xff]
        %v307 = vld [vmem:[%s249 + $0xb0] sm:$0xff]
        %v308 = vld [vmem:[%s249 + $0xb8] sm:$0xff]
        %v309 = vld [vmem:[%s249 + $0xc0] sm:$0xff]
        %v310 = vld [vmem:[%s249 + $0xc8] sm:$0xff]
        %v311 = vld [vmem:[%s249 + $0xd0] sm:$0xff]
        %v312 = vld [vmem:[%s249 + $0xd8] sm:$0xff]
        %v313 = vld [vmem:[%s249 + $0xe0] sm:$0xff]
        %v314 = vld [vmem:[%s249 + $0xe8] sm:$0xff]
        %v315 = vld [vmem:[%s249 + $0xf0] sm:$0xff]
        %v316 = vld [vmem:[%s249 + $0xf8] sm:$0xff]
        %v317 = vld [vmem:[#allocation5] sm:$0xf]
        %v318 = vld [vmem:[#allocation5 + $0x4] sm:$0xf]
        %v319 = vld [vmem:[#allocation5 + $0x8] sm:$0xf]
        %v320 = vld [vmem:[#allocation5 + $0xc] sm:$0xf]
        %v321 = vld [vmem:[#allocation5 + $0x10] sm:$0xf]
        %v322 = vld [vmem:[#allocation5 + $0x14] sm:$0xf]
        %v323 = vld [vmem:[#allocation5 + $0x18] sm:$0xf]
        %v324 = vld [vmem:[#allocation5 + $0x1c] sm:$0xf]
        %v325 = vld [vmem:[#allocation5 + $0x20] sm:$0xf]
        %v326 = vld [vmem:[#allocation5 + $0x24] sm:$0xf]
        %v327 = vld [vmem:[#allocation5 + $0x28] sm:$0xf]
        %v328 = vld [vmem:[#allocation5 + $0x2c] sm:$0xf]
        %v329 = vld [vmem:[#allocation5 + $0x30] sm:$0xf]
        %v330 = vld [vmem:[#allocation5 + $0x34] sm:$0xf]
        %v331 = vld [vmem:[#allocation5 + $0x38] sm:$0xf]
        %v332 = vld [vmem:[#allocation5 + $0x3c] sm:$0xf]
        %v333 = vld [vmem:[#allocation5 + $0x40] sm:$0xf]
        %v334 = vld [vmem:[#allocation5 + $0x44] sm:$0xf]
        %v335 = vld [vmem:[#allocation5 + $0x48] sm:$0xf]
        %v336 = vld [vmem:[#allocation5 + $0x4c] sm:$0xf]
        %v337 = vld [vmem:[#allocation7] sm:$0x1]
        %v339 = vlaneseq
        %v340 = vshrl.u32 %v339, 7
        %v341 = vsub.s32 0, %v340
        %v342 = vrot.slane %v337, %v341
        %v376 = vunpack.c.l.b16 %v285
        %v377 = vunpack.c.h.b16 %v285
        %v378 = vunpack.c.l.b16 %v286
        %v379 = vunpack.c.h.b16 %v286
        %v380 = vunpack.c.l.b16 %v287
        %v381 = vunpack.c.h.b16 %v287
        %v382 = vunpack.c.l.b16 %v288
        %v383 = vunpack.c.h.b16 %v288
        %v384 = vunpack.c.l.b16 %v289
        %v385 = vunpack.c.h.b16 %v289
        %v386 = vunpack.c.l.b16 %v290
        %v387 = vunpack.c.h.b16 %v290
        %v388 = vunpack.c.l.b16 %v291
        %v389 = vunpack.c.h.b16 %v291
        %v390 = vunpack.c.l.b16 %v292
        %v391 = vunpack.c.h.b16 %v292
        %v392 = vunpack.c.l.b16 %v293
        %v393 = vunpack.c.h.b16 %v293
        %v394 = vunpack.c.l.b16 %v294
        %v395 = vunpack.c.h.b16 %v294
        %v396 = vunpack.c.l.b16 %v295
        %v397 = vunpack.c.h.b16 %v295
        %v398 = vunpack.c.l.b16 %v296
        %v399 = vunpack.c.h.b16 %v296
        %v400 = vunpack.c.l.b16 %v297
        %v401 = vunpack.c.h.b16 %v297
        %v402 = vunpack.c.l.b16 %v298
        %v403 = vunpack.c.h.b16 %v298
        %v404 = vunpack.c.l.b16 %v299
        %v405 = vunpack.c.h.b16 %v299
        %v406 = vunpack.c.l.b16 %v300
        %v407 = vunpack.c.h.b16 %v300
        %v408 = vunpack.c.l.b16 %v301
        %v409 = vunpack.c.h.b16 %v301
        %v410 = vunpack.c.l.b16 %v302
        %v411 = vunpack.c.h.b16 %v302
        %v412 = vunpack.c.l.b16 %v303
        %v413 = vunpack.c.h.b16 %v303
        %v414 = vunpack.c.l.b16 %v304
        %v415 = vunpack.c.h.b16 %v304
        %v416 = vunpack.c.l.b16 %v305
        %v417 = vunpack.c.h.b16 %v305
        %v418 = vunpack.c.l.b16 %v306
        %v419 = vunpack.c.h.b16 %v306
        %v420 = vunpack.c.l.b16 %v307
        %v421 = vunpack.c.h.b16 %v307
        %v422 = vunpack.c.l.b16 %v308
        %v423 = vunpack.c.h.b16 %v308
        %v424 = vunpack.c.l.b16 %v309
        %v425 = vunpack.c.h.b16 %v309
        %v426 = vunpack.c.l.b16 %v310
        %v427 = vunpack.c.h.b16 %v310
        %v428 = vunpack.c.l.b16 %v311
        %v429 = vunpack.c.h.b16 %v311
        %v430 = vunpack.c.l.b16 %v312
        %v431 = vunpack.c.h.b16 %v312
        %v432 = vunpack.c.l.b16 %v313
        %v433 = vunpack.c.h.b16 %v313
        %v434 = vunpack.c.l.b16 %v314
        %v435 = vunpack.c.h.b16 %v314
        %v436 = vunpack.c.l.b16 %v315
        %v437 = vunpack.c.h.b16 %v315
        %v438 = vunpack.c.l.b16 %v316
        %v439 = vunpack.c.h.b16 %v316
        %v440 = vpack.c.b16 %v378, %v376
        %v441 = vpack.c.b16 %v379, %v377
        %v442 = vpack.c.b16 %v382, %v380
        %v443 = vpack.c.b16 %v383, %v381
        %v444 = vpack.c.b16 %v386, %v384
        %v445 = vpack.c.b16 %v387, %v385
        %v446 = vpack.c.b16 %v390, %v388
        %v447 = vpack.c.b16 %v391, %v389
        %v448 = vpack.c.b16 %v394, %v392
        %v449 = vpack.c.b16 %v395, %v393
        %v450 = vpack.c.b16 %v398, %v396
        %v451 = vpack.c.b16 %v399, %v397
        %v452 = vpack.c.b16 %v402, %v400
        %v453 = vpack.c.b16 %v403, %v401
        %v454 = vpack.c.b16 %v406, %v404
        %v455 = vpack.c.b16 %v407, %v405
        %v456 = vpack.c.b16 %v410, %v408
        %v457 = vpack.c.b16 %v411, %v409
        %v458 = vpack.c.b16 %v414, %v412
        %v459 = vpack.c.b16 %v415, %v413
        %v460 = vpack.c.b16 %v418, %v416
        %v461 = vpack.c.b16 %v419, %v417
        %v462 = vpack.c.b16 %v422, %v420
        %v463 = vpack.c.b16 %v423, %v421
        %v464 = vpack.c.b16 %v426, %v424
        %v465 = vpack.c.b16 %v427, %v425
        %v466 = vpack.c.b16 %v430, %v428
        %v467 = vpack.c.b16 %v431, %v429
        %v468 = vpack.c.b16 %v434, %v432
        %v469 = vpack.c.b16 %v435, %v433
        %v470 = vpack.c.b16 %v438, %v436
        %v471 = vpack.c.b16 %v439, %v437
        %v508 = vunpack.c.l.b16 %v317
        %v509 = vunpack.c.l.b16 %v318
        %v510 = vunpack.c.l.b16 %v319
        %v511 = vunpack.c.l.b16 %v320
        %v512 = vunpack.c.l.b16 %v321
        %v513 = vunpack.c.l.b16 %v322
        %v514 = vunpack.c.l.b16 %v323
        %v515 = vunpack.c.l.b16 %v324
        %v516 = vunpack.c.l.b16 %v325
        %v517 = vunpack.c.l.b16 %v326
        %v518 = vunpack.c.l.b16 %v327
        %v519 = vunpack.c.l.b16 %v328
        %v520 = vunpack.c.l.b16 %v329
        %v521 = vunpack.c.l.b16 %v330
        %v522 = vunpack.c.l.b16 %v331
        %v523 = vunpack.c.l.b16 %v332
        %v524 = vunpack.c.l.b16 %v333
        %v525 = vunpack.c.l.b16 %v334
        %v526 = vunpack.c.l.b16 %v335
        %v527 = vunpack.c.l.b16 %v336
        %v528 = vpack.c.b16 %v509, %v508
        %v529 = vpack.c.b16 %v511, %v510
        %v530 = vpack.c.b16 %v513, %v512
        %v531 = vpack.c.b16 %v515, %v514
        %v532 = vpack.c.b16 %v517, %v516
        %v533 = vpack.c.b16 %v519, %v518
        %v534 = vpack.c.b16 %v521, %v520
        %v535 = vpack.c.b16 %v523, %v522
        %v536 = vpack.c.b16 %v525, %v524
        %v537 = vpack.c.b16 %v527, %v526
        %vm548 = vcmask 261120
        %v550 = vsel %vm548, %v441, 0
        %v553 = vsel %vm548, %v443, 0
        %v556 = vsel %vm548, %v445, 0
        %v559 = vsel %vm548, %v447, 0
        %v562 = vsel %vm548, %v449, 0
        %v565 = vsel %vm548, %v451, 0
        %v568 = vsel %vm548, %v453, 0
        %v571 = vsel %vm548, %v455, 0
        %v574 = vsel %vm548, %v457, 0
        %v577 = vsel %vm548, %v459, 0
        %v580 = vsel %vm548, %v461, 0
        %v583 = vsel %vm548, %v463, 0
        %v586 = vsel %vm548, %v465, 0
        %v589 = vsel %vm548, %v467, 0
        %v592 = vsel %vm548, %v469, 0
        %v595 = vsel %vm548, %v471, 0
        %597 = vmatprep.subr.bf16.mxu0 0
        %598 = vmatpush1.bf16.msra.mxu0 %v528
        %599 = vmatprep.subr.bf16.mxu0 0
        %600 = vmatpush1.bf16.msra.mxu0 %v529
        %601 = vmatprep.subr.bf16.mxu0 0
        %602 = vmatpush1.bf16.msra.mxu0 %v530
        %603 = vmatprep.subr.bf16.mxu0 0
        %604 = vmatpush1.bf16.msra.mxu0 %v531
        %605 = vmatprep.subr.bf16.mxu0 0
        %606 = vmatpush1.bf16.msra.mxu0 %v532
        %607 = vmatprep.subr.bf16.mxu0 0
        %608 = vmatpush1.bf16.msra.mxu0 %v533
        %609 = vmatprep.subr.bf16.mxu0 0
        %610 = vmatpush1.bf16.msra.mxu0 %v534
        %611 = vmatprep.subr.bf16.mxu0 0
        %612 = vmatpush1.bf16.msra.mxu0 %v535
        %613 = vmatprep.subr.bf16.mxu0 0
        %614 = vmatpush1.bf16.msra.mxu0 %v536
        %615 = vmatprep.subr.bf16.mxu0 0
        %616 = vmatpush1.bf16.msra.mxu0 %v537
        %617 = vmatprep.subr.bf16.mxu0 0
        %618 = vmatpush1.bf16.msra.mxu0 0
        %619 = vmatprep.subr.bf16.mxu0 0
        %620 = vmatpush1.bf16.msra.mxu0 0
        %621 = vmatprep.subr.bf16.mxu0 0
        %622 = vmatpush1.bf16.msra.mxu0 0
        %623 = vmatprep.subr.bf16.mxu0 0
        %624 = vmatpush1.bf16.msra.mxu0 0
        %625 = vmatprep.subr.bf16.mxu0 0
        %626 = vmatpush1.bf16.msra.mxu0 0
        %627 = vmatprep.subr.bf16.mxu0 0
        %628 = vmatpush1.bf16.msra.mxu0 0
        %629 = vmatprep.mubr.bf16.mxu0 %v550
        %630 = vmatmul.mubr.bf16.gmra.mrb[0].mxu0 %v440
        %v631 = vpop.f32.mrb[0].mxu0
        %v632 = vadd.f32 %v342, %v631
        %v633 = vpop.f32.mrb[0].mxu0
        %v634 = vpop.f32.mrb[0].mxu0
        %v635 = vadd.f32 %v342, %v634
        %v636 = vpop.f32.mrb[0].mxu0
        %637 = vmatprep.mubr.bf16.mxu0 %v553
        %638 = vmatmul.mubr.bf16.gmra.mrb[0].mxu0 %v442
        %v639 = vpop.f32.mrb[0].mxu0
        %v640 = vadd.f32 %v342, %v639
        %v641 = vpop.f32.mrb[0].mxu0
        %v642 = vpop.f32.mrb[0].mxu0
        %v643 = vadd.f32 %v342, %v642
        %v644 = vpop.f32.mrb[0].mxu0
        %645 = vmatprep.mubr.bf16.mxu0 %v556
        %646 = vmatmul.mubr.bf16.gmra.mrb[0].mxu0 %v444
        %v647 = vpop.f32.mrb[0].mxu0
        %v648 = vadd.f32 %v342, %v647
        %v649 = vpop.f32.mrb[0].mxu0
        %v650 = vpop.f32.mrb[0].mxu0
        %v651 = vadd.f32 %v342, %v650
        %v652 = vpop.f32.mrb[0].mxu0
        %653 = vmatprep.mubr.bf16.mxu0 %v559
        %654 = vmatmul.mubr.bf16.gmra.mrb[0].mxu0 %v446
        %v655 = vpop.f32.mrb[0].mxu0
        %v656 = vadd.f32 %v342, %v655
        %v657 = vpop.f32.mrb[0].mxu0
        %v658 = vpop.f32.mrb[0].mxu0
        %v659 = vadd.f32 %v342, %v658
        %v660 = vpop.f32.mrb[0].mxu0
        %661 = vmatprep.mubr.bf16.mxu0 %v562
        %662 = vmatmul.mubr.bf16.gmra.mrb[0].mxu0 %v448
        %v663 = vpop.f32.mrb[0].mxu0
        %v664 = vadd.f32 %v342, %v663
        %v665 = vpop.f32.mrb[0].mxu0
        %v666 = vpop.f32.mrb[0].mxu0
        %v667 = vadd.f32 %v342, %v666
        %v668 = vpop.f32.mrb[0].mxu0
        %669 = vmatprep.mubr.bf16.mxu0 %v565
        %670 = vmatmul.mubr.bf16.gmra.mrb[0].mxu0 %v450
        %v671 = vpop.f32.mrb[0].mxu0
        %v672 = vadd.f32 %v342, %v671
        %v673 = vpop.f32.mrb[0].mxu0
        %v674 = vpop.f32.mrb[0].mxu0
        %v675 = vadd.f32 %v342, %v674
        %v676 = vpop.f32.mrb[0].mxu0
        %677 = vmatprep.mubr.bf16.mxu0 %v568
        %678 = vmatmul.mubr.bf16.gmra.mrb[0].mxu0 %v452
        %v679 = vpop.f32.mrb[0].mxu0
        %v680 = vadd.f32 %v342, %v679
        %v681 = vpop.f32.mrb[0].mxu0
        %v682 = vpop.f32.mrb[0].mxu0
        %v683 = vadd.f32 %v342, %v682
        %v684 = vpop.f32.mrb[0].mxu0
        %685 = vmatprep.mubr.bf16.mxu0 %v571
        %686 = vmatmul.mubr.bf16.gmra.mrb[0].mxu0 %v454
        %v687 = vpop.f32.mrb[0].mxu0
        %v688 = vadd.f32 %v342, %v687
        %v689 = vpop.f32.mrb[0].mxu0
        %v690 = vpop.f32.mrb[0].mxu0
        %v691 = vadd.f32 %v342, %v690
        %v692 = vpop.f32.mrb[0].mxu0
        %693 = vmatprep.mubr.bf16.mxu0 %v574
        %694 = vmatmul.mubr.bf16.gmra.mrb[0].mxu0 %v456
        %v695 = vpop.f32.mrb[0].mxu0
        %v696 = vadd.f32 %v342, %v695
        %v697 = vpop.f32.mrb[0].mxu0
        %v698 = vpop.f32.mrb[0].mxu0
        %v699 = vadd.f32 %v342, %v698
        %v700 = vpop.f32.mrb[0].mxu0
        %701 = vmatprep.mubr.bf16.mxu0 %v577
        %702 = vmatmul.mubr.bf16.gmra.mrb[0].mxu0 %v458
        %v703 = vpop.f32.mrb[0].mxu0
        %v704 = vadd.f32 %v342, %v703
        %v705 = vpop.f32.mrb[0].mxu0
        %v706 = vpop.f32.mrb[0].mxu0
        %v707 = vadd.f32 %v342, %v706
        %v708 = vpop.f32.mrb[0].mxu0
        %709 = vmatprep.mubr.bf16.mxu0 %v580
        %710 = vmatmul.mubr.bf16.gmra.mrb[0].mxu0 %v460
        %v711 = vpop.f32.mrb[0].mxu0
        %v712 = vadd.f32 %v342, %v711
        %v713 = vpop.f32.mrb[0].mxu0
        %v714 = vpop.f32.mrb[0].mxu0
        %v715 = vadd.f32 %v342, %v714
        %v716 = vpop.f32.mrb[0].mxu0
        %717 = vmatprep.mubr.bf16.mxu0 %v583
        %718 = vmatmul.mubr.bf16.gmra.mrb[0].mxu0 %v462
        %v719 = vpop.f32.mrb[0].mxu0
        %v720 = vadd.f32 %v342, %v719
        %v721 = vpop.f32.mrb[0].mxu0
        %v722 = vpop.f32.mrb[0].mxu0
        %v723 = vadd.f32 %v342, %v722
        %v724 = vpop.f32.mrb[0].mxu0
        %725 = vmatprep.mubr.bf16.mxu0 %v586
        %726 = vmatmul.mubr.bf16.gmra.mrb[0].mxu0 %v464
        %v727 = vpop.f32.mrb[0].mxu0
        %v728 = vadd.f32 %v342, %v727
        %v729 = vpop.f32.mrb[0].mxu0
        %v730 = vpop.f32.mrb[0].mxu0
        %v731 = vadd.f32 %v342, %v730
        %v732 = vpop.f32.mrb[0].mxu0
        %733 = vmatprep.mubr.bf16.mxu0 %v589
        %734 = vmatmul.mubr.bf16.gmra.mrb[0].mxu0 %v466
        %v735 = vpop.f32.mrb[0].mxu0
        %v736 = vadd.f32 %v342, %v735
        %v737 = vpop.f32.mrb[0].mxu0
        %v738 = vpop.f32.mrb[0].mxu0
        %v739 = vadd.f32 %v342, %v738
        %v740 = vpop.f32.mrb[0].mxu0
        %741 = vmatprep.mubr.bf16.mxu0 %v592
        %742 = vmatmul.mubr.bf16.gmra.mrb[0].mxu0 %v468
        %v743 = vpop.f32.mrb[0].mxu0
        %v744 = vadd.f32 %v342, %v743
        %v745 = vpop.f32.mrb[0].mxu0
        %v746 = vpop.f32.mrb[0].mxu0
        %v747 = vadd.f32 %v342, %v746
        %v748 = vpop.f32.mrb[0].mxu0
        %749 = vmatprep.mubr.bf16.mxu0 %v595
        %750 = vmatmul.mubr.bf16.gmra.mrb[0].mxu0 %v470
        %v751 = vpop.f32.mrb[0].mxu0
        %v752 = vadd.f32 %v342, %v751
        %v753 = vpop.f32.mrb[0].mxu0
        %v754 = vpop.f32.mrb[0].mxu0
        %v755 = vadd.f32 %v342, %v754
        %v756 = vpop.f32.mrb[0].mxu0
        %757 = vdwg.mxu0
        %v758 = vmax.f32 %v632, 0.0
        %v759 = vmax.f32 %v635, 0.0
        %v760 = vmax.f32 %v640, 0.0
        %v761 = vmax.f32 %v643, 0.0
        %v762 = vmax.f32 %v648, 0.0
        %v763 = vmax.f32 %v651, 0.0
        %v764 = vmax.f32 %v656, 0.0
        %v765 = vmax.f32 %v659, 0.0
        %v766 = vmax.f32 %v664, 0.0
        %v767 = vmax.f32 %v667, 0.0
        %v768 = vmax.f32 %v672, 0.0
        %v769 = vmax.f32 %v675, 0.0
        %v770 = vmax.f32 %v680, 0.0
        %v771 = vmax.f32 %v683, 0.0
        %v772 = vmax.f32 %v688, 0.0
        %v773 = vmax.f32 %v691, 0.0
        %v774 = vmax.f32 %v696, 0.0
        %v775 = vmax.f32 %v699, 0.0
        %v776 = vmax.f32 %v704, 0.0
        %v777 = vmax.f32 %v707, 0.0
        %v778 = vmax.f32 %v712, 0.0
        %v779 = vmax.f32 %v715, 0.0
        %v780 = vmax.f32 %v720, 0.0
        %v781 = vmax.f32 %v723, 0.0
        %v782 = vmax.f32 %v728, 0.0
        %v783 = vmax.f32 %v731, 0.0
        %v784 = vmax.f32 %v736, 0.0
        %v785 = vmax.f32 %v739, 0.0
        %v786 = vmax.f32 %v744, 0.0
        %v787 = vmax.f32 %v747, 0.0
        %v788 = vmax.f32 %v752, 0.0
        %v789 = vmax.f32 %v755, 0.0
        %v790 = vpack.c.bf16 %v759, %v758
        %v791 = vpack.c.bf16 %v761, %v760
        %v792 = vpack.c.bf16 %v763, %v762
        %v793 = vpack.c.bf16 %v765, %v764
        %v794 = vpack.c.bf16 %v767, %v766
        %v795 = vpack.c.bf16 %v769, %v768
        %v796 = vpack.c.bf16 %v771, %v770
        %v797 = vpack.c.bf16 %v773, %v772
        %v798 = vpack.c.bf16 %v775, %v774
        %v799 = vpack.c.bf16 %v777, %v776
        %v800 = vpack.c.bf16 %v779, %v778
        %v801 = vpack.c.bf16 %v781, %v780
        %v802 = vpack.c.bf16 %v783, %v782
        %v803 = vpack.c.bf16 %v785, %v784
        %v804 = vpack.c.bf16 %v787, %v786
        %v805 = vpack.c.bf16 %v789, %v788
        %v822 = vunpack.c.l.b16 %v790
        %v823 = vunpack.c.h.b16 %v790
        %v824 = vunpack.c.l.b16 %v791
        %v825 = vunpack.c.h.b16 %v791
        %v826 = vunpack.c.l.b16 %v792
        %v827 = vunpack.c.h.b16 %v792
        %v828 = vunpack.c.l.b16 %v793
        %v829 = vunpack.c.h.b16 %v793
        %v830 = vunpack.c.l.b16 %v794
        %v831 = vunpack.c.h.b16 %v794
        %v832 = vunpack.c.l.b16 %v795
        %v833 = vunpack.c.h.b16 %v795
        %v834 = vunpack.c.l.b16 %v796
        %v835 = vunpack.c.h.b16 %v796
        %v836 = vunpack.c.l.b16 %v797
        %v837 = vunpack.c.h.b16 %v797
        %v838 = vunpack.c.l.b16 %v798
        %v839 = vunpack.c.h.b16 %v798
        %v840 = vunpack.c.l.b16 %v799
        %v841 = vunpack.c.h.b16 %v799
        %v842 = vunpack.c.l.b16 %v800
        %v843 = vunpack.c.h.b16 %v800
        %v844 = vunpack.c.l.b16 %v801
        %v845 = vunpack.c.h.b16 %v801
        %v846 = vunpack.c.l.b16 %v802
        %v847 = vunpack.c.h.b16 %v802
        %v848 = vunpack.c.l.b16 %v803
        %v849 = vunpack.c.h.b16 %v803
        %v850 = vunpack.c.l.b16 %v804
        %v851 = vunpack.c.h.b16 %v804
        %v852 = vunpack.c.l.b16 %v805
        %v853 = vunpack.c.h.b16 %v805
        %v854 = vpack.c.b16 %v822, %v822
        %v855 = vpack.c.b16 %v823, %v823
        %v856 = vpack.c.b16 %v824, %v824
        %v857 = vpack.c.b16 %v825, %v825
        %v858 = vpack.c.b16 %v826, %v826
        %v859 = vpack.c.b16 %v827, %v827
        %v860 = vpack.c.b16 %v828, %v828
        %v861 = vpack.c.b16 %v829, %v829
        %v862 = vpack.c.b16 %v830, %v830
        %v863 = vpack.c.b16 %v831, %v831
        %v864 = vpack.c.b16 %v832, %v832
        %v865 = vpack.c.b16 %v833, %v833
        %v866 = vpack.c.b16 %v834, %v834
        %v867 = vpack.c.b16 %v835, %v835
        %v868 = vpack.c.b16 %v836, %v836
        %v869 = vpack.c.b16 %v837, %v837
        %v870 = vpack.c.b16 %v838, %v838
        %v871 = vpack.c.b16 %v839, %v839
        %v872 = vpack.c.b16 %v840, %v840
        %v873 = vpack.c.b16 %v841, %v841
        %v874 = vpack.c.b16 %v842, %v842
        %v875 = vpack.c.b16 %v843, %v843
        %v876 = vpack.c.b16 %v844, %v844
        %v877 = vpack.c.b16 %v845, %v845
        %v878 = vpack.c.b16 %v846, %v846
        %v879 = vpack.c.b16 %v847, %v847
        %v880 = vpack.c.b16 %v848, %v848
        %v881 = vpack.c.b16 %v849, %v849
        %v882 = vpack.c.b16 %v850, %v850
        %v883 = vpack.c.b16 %v851, %v851
        %v884 = vpack.c.b16 %v852, %v852
        %v885 = vpack.c.b16 %v853, %v853
        %918 = vst [vmem:[%s279] sm:$0xf] %v854
        %919 = vst [vmem:[%s279 + $0x4] sm:$0xf] %v855
        %920 = vst [vmem:[%s279 + $0x8] sm:$0xf] %v856
        %921 = vst [vmem:[%s279 + $0xc] sm:$0xf] %v857
        %922 = vst [vmem:[%s279 + $0x10] sm:$0xf] %v858
        %923 = vst [vmem:[%s279 + $0x14] sm:$0xf] %v859
        %924 = vst [vmem:[%s279 + $0x18] sm:$0xf] %v860
        %925 = vst [vmem:[%s279 + $0x1c] sm:$0xf] %v861
        %926 = vst [vmem:[%s279 + $0x20] sm:$0xf] %v862
        %927 = vst [vmem:[%s279 + $0x24] sm:$0xf] %v863
        %928 = vst [vmem:[%s279 + $0x28] sm:$0xf] %v864
        %929 = vst [vmem:[%s279 + $0x2c] sm:$0xf] %v865
        %930 = vst [vmem:[%s279 + $0x30] sm:$0xf] %v866
        %931 = vst [vmem:[%s279 + $0x34] sm:$0xf] %v867
        %932 = vst [vmem:[%s279 + $0x38] sm:$0xf] %v868
        %933 = vst [vmem:[%s279 + $0x3c] sm:$0xf] %v869
        %934 = vst [vmem:[%s279 + $0x40] sm:$0xf] %v870
        %935 = vst [vmem:[%s279 + $0x44] sm:$0xf] %v871
        %936 = vst [vmem:[%s279 + $0x48] sm:$0xf] %v872
        %937 = vst [vmem:[%s279 + $0x4c] sm:$0xf] %v873
        %938 = vst [vmem:[%s279 + $0x50] sm:$0xf] %v874
        %939 = vst [vmem:[%s279 + $0x54] sm:$0xf] %v875
        %940 = vst [vmem:[%s279 + $0x58] sm:$0xf] %v876
        %941 = vst [vmem:[%s279 + $0x5c] sm:$0xf] %v877
        %942 = vst [vmem:[%s279 + $0x60] sm:$0xf] %v878
        %943 = vst [vmem:[%s279 + $0x64] sm:$0xf] %v879
        %944 = vst [vmem:[%s279 + $0x68] sm:$0xf] %v880
        %945 = vst [vmem:[%s279 + $0x6c] sm:$0xf] %v881
        %946 = vst [vmem:[%s279 + $0x70] sm:$0xf] %v882
        %947 = vst [vmem:[%s279 + $0x74] sm:$0xf] %v883
        %948 = vst [vmem:[%s279 + $0x78] sm:$0xf] %v884
        %949 = vst [vmem:[%s279 + $0x7c] sm:$0xf] %v885
        %s950 = sand.u32 %s147, 1
        %s951 = scalar_lea.sflag [#allocation4], %s950
        %s952 = sand.u32 %s147, 1
        %s953 = smul.addr %s952, 128
        %s954 = scalar_lea.vmem [#allocation8], %s953
        // Predicated region
        $region45: #{tpu_custom_call.1} parent=31 // pred_check
          %p955 = pneg %p157
        $region46: #{tpu_custom_call.1} parent=31 // pred_check_branch
          %957 = sbr.rel (%p955) target = $region48
        $region47: #{tpu_custom_call.1} parent=31 // pred_region
          %s958 = smul.u32 32, %s28
          %s960 = ssub.s32 2048, 2048
          %961 = vsyncadd %s951, %s960
          %s962 = sadd.s32 %s29, %s958
          %s963 = smul.addr %s27, 192
          %s964 = sadd.s32 %s962, %s963
          %s965 = smul.addr %s964, 64
          %s966 = scalar_lea.hbm %s3, %s965
          %s967 = sshll.u32 %s954, 4
          %s968 = int_to_ptr.vmem [resolvable:$true] %s967
          %973 = dma.vmem_to_hbm [thread:$0]  %s968, 2048, %s966, %s951, 64, 64, 4
        $region48: #{tpu_custom_call.1} parent=31 // pred_fallthru
          _
      $region32: #{tpu_custom_call.1} parent=5 // pred_fallthru
        _
      %p974 = scmp.le.s32.totalorder 2, %s16
      // Predicated region
      $region49: #{tpu_custom_call.1} parent=5 // pred_check
        %p975 = pneg %p974
      $region50: #{tpu_custom_call.1} parent=5 // pred_check_branch
        %977 = sbr.rel (%p975) target = $region52
      $region51: #{tpu_custom_call.1} parent=5 // pred_region
        %s978 = ssub.s32 %s16, 2
        // Predicated region
        $region53: #{tpu_custom_call.1} parent=51 // pred_check
          %p979 = pneg %p163
        $region54: #{tpu_custom_call.1} parent=51 // pred_check_branch
          %981 = sbr.rel (%p979) target = $region56
        $region55: #{tpu_custom_call.1} parent=51 // pred_region
          %s982 = sand.u32 %s148, 1
          %s983 = scalar_lea.sflag [#allocation4], %s982
          %s984 = sand.u32 %s148, 1
          %s985 = smul.addr %s984, 128
          %s986 = scalar_lea.vmem [#allocation8], %s985
          %987 = dma.done %s983, 2048
        $region56: #{tpu_custom_call.1} parent=51 // pred_fallthru
          _
      $region52: #{tpu_custom_call.1} parent=5 // pred_fallthru
        _
    $region6: #{tpu_custom_call.1} parent=1 // loop_footer
      %s20 = sadd.s32 1, %s16
    $region7: #{tpu_custom_call.1} parent=1 // loop_footer_branch
      %15 = sbr.rel target = $region3
    $region8: #{tpu_custom_call.1} parent=1 // loop_exit
      _
    %988 = vsyncpa [#allocation3], 1
    %s989 = scalar_lea.sflag [#allocation3], 1
    %990 = vsyncpa %s989, 1
    %991 = vsyncpa [#allocation6], 1
    %992 = vsyncpa [#allocation4], 1
    %s993 = scalar_lea.sflag [#allocation4], 1
    %994 = vsyncpa %s993, 1

</llo_original>
